<compile_context>
chip_gen: v7x
topology: tpu7x:2x2x1
jax: 0.10.0
libtpu: 0.0.40
codegen_flags: <defaults>
</compile_context>

<pallas_src>
import jax
import jax.numpy as jnp
from jax import lax
from jax.experimental import pallas as pl
from jax.experimental.pallas import tpu as pltpu

N_EMBD = 64
NUM_HEADS = 4
HEAD_SIZE = N_EMBD // NUM_HEADS   # 16
BLOCK_SIZE = 32                   # causal-mask capacity of the reference module

MM_DTYPE = jnp.bfloat16           # MXU operand dtype; accumulation stays f32
NEG_INF = -1e30                   # finite mask value -> NaN-safe softmax

_NUM_TC_CACHE = None


def _num_tensorcores():
    """Best-effort TensorCores-per-chip (1 on v5e/v6e, 2 on v4/v5p/v7x)."""
    global _NUM_TC_CACHE
    if _NUM_TC_CACHE is not None:
        return _NUM_TC_CACHE
    n = None
    try:
        info = pltpu.get_tpu_info()
        for name in ("num_tensorcores", "tensor_cores_per_chip", "cores_per_chip"):
            v = getattr(info, name, None)
            if isinstance(v, int) and v > 0:
                n = v
                break
    except Exception:
        n = None
    if n is None:
        try:
            kind = jax.devices()[0].device_kind.lower()
        except Exception:
            kind = ""
        # single-TensorCore generations: v5e ("v5 lite"/"v5e"), v6e ("v6 lite"/"v6e")
        n = 1 if (("lite" in kind) or ("v5e" in kind) or ("v6e" in kind)) else 2
    _NUM_TC_CACHE = n
    return n


def _make_mha_kernel(b_blk, t, h, hs):
    c = h * hs

    def kernel(x_ref, wqkv_ref, wp_ref, bp_ref, o_ref):
        # x_ref: (R, C) f32, R = b_blk*T    wqkv_ref: (C, 3C) bf16 (Q pre-scaled)
        # wp_ref: (C, C) bf16               bp_ref: (1, C) f32
        # o_ref:  (R, C) f32
        x = x_ref[...].astype(MM_DTYPE)                       # one slab cast

        # fused QKV projection; one slab cast to bf16 for all downstream MXU ops
        qkv = jnp.dot(x, wqkv_ref[...],
                      preferred_element_type=jnp.float32).astype(MM_DTYPE)  # (R, 3C)

        # causal (tril) mask, built once for all heads / batch rows
        row = lax.broadcasted_iota(jnp.int32, (t, t), 0)
        col = lax.broadcasted_iota(jnp.int32, (t, t), 1)
        causal = (col <= row)[None, :, :]                     # (1, T, T)

        head_outs = []
        for hd in range(h):                                   # 4-iteration static loop
            lo = hd * hs
            q = qkv[:, lo:lo + hs].reshape(b_blk, t, hs)          # free leading split
            k = qkv[:, c + lo:c + lo + hs].reshape(b_blk, t, hs)
            v = qkv[:, 2 * c + lo:2 * c + lo + hs].reshape(b_blk, t, hs)

            # batched QK^T over b_blk: contract the head dim directly (no k.T)
            s = lax.dot_general(q, k, (((2,), (2,)), ((0,), (0,))),
                                preferred_element_type=jnp.float32)  # (b_blk, T, T)
            s = jnp.where(causal, s, NEG_INF)

            # softmax in f32; divide goes to the EUP via approx reciprocal
            m = jnp.max(s, axis=-1, keepdims=True)
            e = jnp.exp(s - m)
            p = e * pl.reciprocal(jnp.sum(e, axis=-1, keepdims=True), approx=True)

            # batched P @ V
            head_outs.append(
                lax.dot_general(p.astype(MM_DTYPE), v, (((2,), (1,)), ((0,), (0,))),
                                preferred_element_type=jnp.float32))  # (b_blk, T, hs)

        # lane-concat the heads, then ONE fused (R,C)@(C,C) output projection
        heads = jnp.concatenate(head_outs, axis=-1).reshape(b_blk * t, c)
        proj = jnp.dot(heads.astype(MM_DTYPE), wp_ref[...],
                       preferred_element_type=jnp.float32)            # (R, C) f32

        # bias folded in once; single whole-slab store
        o_ref[...] = (proj + bp_ref[...]).astype(o_ref.dtype)

    return kernel


def prepare_mha_params(wq, wk, wv, wp, bp):
    """Fuse / pre-scale weights ONCE at parameter-init time (not per forward).

    wq/wk/wv: (H, C, hs); wp: (C, C); bp: (1, C).
    Returns (w_qkv (C,3C) bf16 with Q columns pre-scaled, wp bf16, bp f32)."""
    h, c, hs = wq.shape
    scale = c ** (-0.5)            # reference scales by C (= n_embd); 0.125 exact in bf16

    def heads_to_cols(w):          # (H, C, hs) -> (C, H*hs)
        return jnp.transpose(w, (1, 0, 2)).reshape(c, h * hs)

    w_qkv = jnp.concatenate(
        [heads_to_cols(wq) * scale,            # fold score scale into Q columns
         heads_to_cols(wk),
         heads_to_cols(wv)], axis=1).astype(MM_DTYPE)          # (C, 3C) bf16
    return w_qkv, wp.astype(MM_DTYPE), bp.astype(jnp.float32)


def multi_head_attention(x, w_qkv, wp_mm, bp, num_heads=NUM_HEADS):
    """x: (B, T, C) f32; w_qkv/wp_mm/bp from prepare_mha_params. Returns (B, T, C) f32."""
    B, T, C = x.shape
    assert T <= BLOCK_SIZE, "T exceeds the module's causal-mask block_size"
    H = num_heads
    hs = C // H

    # 2 batch blocks only where a 2nd TensorCore exists (v7x / megacore);
    # a single grid step on v5e / v6e (serial loop there would be pure overhead).
    n_blocks = 1
    if _num_tensorcores() >= 2 and B % 2 == 0 and ((B * T) // 2) % 8 == 0:
        n_blocks = 2
    b_blk = B // n_blocks
    R = b_blk * T                  # rows per block

    x2 = x.reshape(B * T, C)       # free contiguous reshape outside the kernel

    out2 = pl.pallas_call(
        _make_mha_kernel(b_blk, T, H, hs),
        out_shape=jax.ShapeDtypeStruct((B * T, C), jnp.float32),
        grid_spec=pltpu.PrefetchScalarGridSpec(
            num_scalar_prefetch=0,
            grid=(n_blocks,),
            in_specs=[pl.BlockSpec((R, C), lambda i: (i, 0)),
                      pl.BlockSpec((C, 3 * C), lambda i: (0, 0)),   # grid-invariant
                      pl.BlockSpec((C, C), lambda i: (0, 0)),
                      pl.BlockSpec((1, C), lambda i: (0, 0))],
            out_specs=pl.BlockSpec((R, C), lambda i: (i, 0)),
        ),
        compiler_params=pltpu.CompilerParams(
            dimension_semantics=("parallel",)),
    )(x2, w_qkv, wp_mm, bp)
    return out2.reshape(B, T, C)


def reference_mha_f32(x, wq, wk, wv, wp, bp):
    """Pure-f32 JAX mirror of the PyTorch forward (per-head, concat, proj)."""
    B, T, C = x.shape
    r = jnp.arange(T)[:, None]
    cidx = jnp.arange(T)[None, :]
    outs = []
    for h in range(wq.shape[0]):
        q = x @ wq[h]
        k = x @ wk[h]
        v = x @ wv[h]
        wei = (q @ jnp.swapaxes(k, -2, -1)) * C ** (-0.5)
        wei = jnp.where(cidx <= r, wei, -jnp.inf)
        wei = jax.nn.softmax(wei, axis=-1)
        outs.append(wei @ v)
    out = jnp.concatenate(outs, axis=-1)
    return out @ wp + bp


def reference_mha_matched(x, wq, wk, wv, wp, bp):
    """Reference mirroring the kernel's dataflow / bf16 matmul operands
    (exact softmax divide instead of the EUP approx reciprocal)."""
    B, T, C = x.shape
    H, _, hs = wq.shape
    w_qkv, wp_mm, bpf = prepare_mha_params(wq, wk, wv, wp, bp)
    qkv = jnp.dot(x.reshape(B * T, C).astype(MM_DTYPE), w_qkv,
                  preferred_element_type=jnp.float32).astype(MM_DTYPE)
    causal = (jnp.arange(T)[None, :] <= jnp.arange(T)[:, None])[None]
    heads = []
    for h in range(H):
        lo = h * hs
        q = qkv[:, lo:lo + hs].reshape(B, T, hs)
        k = qkv[:, C + lo:C + lo + hs].reshape(B, T, hs)
        v = qkv[:, 2 * C + lo:2 * C + lo + hs].reshape(B, T, hs)
        s = jnp.einsum('bqd,bkd->bqk', q, k, preferred_element_type=jnp.float32)
        s = jnp.where(causal, s, NEG_INF)
        m = jnp.max(s, axis=-1, keepdims=True)
        e = jnp.exp(s - m)
        p = e / jnp.sum(e, axis=-1, keepdims=True)
        heads.append(jnp.einsum('bqk,bkd->bqd', p.astype(MM_DTYPE), v,
                                preferred_element_type=jnp.float32))
    hc = jnp.concatenate(heads, axis=-1).reshape(B * T, C).astype(MM_DTYPE)
    out = jnp.dot(hc, wp_mm, preferred_element_type=jnp.float32) + bpf
    return out.reshape(B, T, C)


if __name__ == "__main__":
    key = jax.random.PRNGKey(0)
    k_x, k_q, k_k, k_v, k_p, k_b = jax.random.split(key, 6)

    B, T, C = 2, 8, N_EMBD          # T <= block_size (32)
    H, hs = NUM_HEADS, HEAD_SIZE

    x = jax.random.normal(k_x, (B, T, C), dtype=jnp.float32)

    # deterministic synthetic parameters (nn.Linear-like scale)
    wq = jax.random.normal(k_q, (H, C, hs), dtype=jnp.float32) * (1.0 / C ** 0.5)
    wk = jax.random.normal(k_k, (H, C, hs), dtype=jnp.float32) * (1.0 / C ** 0.5)
    wv = jax.random.normal(k_v, (H, C, hs), dtype=jnp.float32) * (1.0 / C ** 0.5)
    wp = jax.random.normal(k_p, (C, C), dtype=jnp.float32) * (1.0 / C ** 0.5)
    bp = jax.random.normal(k_b, (1, C), dtype=jnp.float32) * 0.01

    # weight fusion done ONCE here (parameter-init time), not in the forward path
    w_qkv, wp_mm, bpf = prepare_mha_params(wq, wk, wv, wp, bp)

    mha = jax.jit(multi_head_attention)
    out = jax.block_until_ready(mha(x, w_qkv, wp_mm, bpf))
    assert out.shape == (B, T, C)

    # tight check vs a reference mirroring the kernel's dataflow / bf16 operands
    ref_m = reference_mha_matched(x, wq, wk, wv, wp, bp)
    assert jnp.allclose(out, ref_m, atol=2e-2, rtol=2e-2), "mismatch vs matched reference"

    # looser check vs the pure-f32 PyTorch-equivalent forward: bf16 matmul
    # operands introduce O(1e-2) absolute differences on O(1) outputs.
    ref_f = reference_mha_f32(x, wq, wk, wv, wp, bp)
    assert jnp.allclose(out, ref_f, atol=1e-1, rtol=1e-1), "mismatch vs f32 reference"

    print("KERNEL_OK")
</pallas_src>

<mosaic_0001>
module attributes {stable_mosaic.version = 11 : i64} {
  func.func @kernel(%arg0: i32, %arg1: memref<8x64xf32, #tpu.memory_space<vmem>>, %arg2: memref<64x192xbf16, #tpu.memory_space<vmem>>, %arg3: memref<64x64xbf16, #tpu.memory_space<vmem>>, %arg4: memref<1x64xf32, #tpu.memory_space<vmem>>, %arg5: memref<8x64xf32, #tpu.memory_space<vmem>>) attributes {dimension_semantics = [#tpu.dimension_semantics<parallel>], iteration_bounds = array<i64: 2>, scalar_prefetch = 0 : i64, scratch_operands = 0 : i64, tpu.core_type = #tpu.core_type<tc>, window_params = [{transform_indices = @transform_0, window_bounds = array<i64: 8, 64>}, {pipeline_mode = #tpu.pipeline_mode<synchronous>, transform_indices = @transform_1, window_bounds = array<i64: 64, 192>}, {pipeline_mode = #tpu.pipeline_mode<synchronous>, transform_indices = @transform_2, window_bounds = array<i64: 64, 64>}, {pipeline_mode = #tpu.pipeline_mode<synchronous>, transform_indices = @transform_3, window_bounds = array<i64: 1, 64>}, {transform_indices = @transform_4, window_bounds = array<i64: 8, 64>}]} {
    %c0 = arith.constant 0 : index
    %c0_0 = arith.constant 0 : index
    %0 = vector.load %arg1[%c0, %c0_0] : memref<8x64xf32, #tpu.memory_space<vmem>>, vector<8x64xf32>
    %1 = arith.truncf %0 : vector<8x64xf32> to vector<8x64xbf16>
    %c0_1 = arith.constant 0 : index
    %c0_2 = arith.constant 0 : index
    %2 = vector.load %arg2[%c0_1, %c0_2] : memref<64x192xbf16, #tpu.memory_space<vmem>>, vector<64x192xbf16>
    %cst = arith.constant dense<0.000000e+00> : vector<8x192xf32>
    %3 = tpu.matmul %1, %2, %cst {dimension_numbers = #tpu.dot_dimension_numbers<[1], [0], [0], [1], [0, 0, 1, 1], [], []>} : vector<8x64xbf16>, vector<64x192xbf16>, vector<8x192xf32> -> vector<8x192xf32>
    %4 = arith.truncf %3 : vector<8x192xf32> to vector<8x192xbf16>
    %5 = tpu.iota {dimensions = array<i32: 0>} : vector<8x8xi32>
    %6 = tpu.iota {dimensions = array<i32: 1>} : vector<8x8xi32>
    %7 = arith.cmpi sle, %6, %5 : vector<8x8xi32>
    %8 = vector.shape_cast %7 : vector<8x8xi1> to vector<1x8x8xi1>
    %9 = vector.extract_strided_slice %4 {offsets = [0, 0], sizes = [8, 16], strides = [1, 1]} : vector<8x192xbf16> to vector<8x16xbf16>
    %10 = vector.shape_cast %9 : vector<8x16xbf16> to vector<1x8x16xbf16>
    %11 = vector.extract_strided_slice %4 {offsets = [0, 64], sizes = [8, 16], strides = [1, 1]} : vector<8x192xbf16> to vector<8x16xbf16>
    %12 = vector.shape_cast %11 : vector<8x16xbf16> to vector<1x8x16xbf16>
    %13 = vector.extract_strided_slice %4 {offsets = [0, 128], sizes = [8, 16], strides = [1, 1]} : vector<8x192xbf16> to vector<8x16xbf16>
    %14 = vector.shape_cast %13 : vector<8x16xbf16> to vector<1x8x16xbf16>
    %cst_3 = arith.constant dense<0.000000e+00> : vector<1x8x8xf32>
    %15 = tpu.matmul %10, %12, %cst_3 {dimension_numbers = #tpu.dot_dimension_numbers<[2], [2], [1], [1], [0, 0, 0, 1, 1, 1], [0], [0]>} : vector<1x8x16xbf16>, vector<1x8x16xbf16>, vector<1x8x8xf32> -> vector<1x8x8xf32>
    %cst_4 = arith.constant -1.000000e+30 : f32
    %16 = vector.broadcast %cst_4 : f32 to vector<1x8x8xf32>
    %17 = arith.select %8, %15, %16 : vector<1x8x8xi1>, vector<1x8x8xf32>
    %cst_5 = arith.constant dense<0xFF800000> : vector<1x8xf32>
    %18 = vector.multi_reduction <maximumf>, %17, %cst_5 [2] : vector<1x8x8xf32> to vector<1x8xf32>
    %19 = vector.shape_cast %18 : vector<1x8xf32> to vector<1x8x1xf32>
    %20 = vector.broadcast %19 : vector<1x8x1xf32> to vector<1x8x8xf32>
    %21 = arith.subf %17, %20 : vector<1x8x8xf32>
    %22 = math.exp %21 : vector<1x8x8xf32>
    %cst_6 = arith.constant dense<0.000000e+00> : vector<1x8xf32>
    %23 = vector.multi_reduction <add>, %22, %cst_6 [2] : vector<1x8x8xf32> to vector<1x8xf32>
    %24 = vector.shape_cast %23 : vector<1x8xf32> to vector<1x8x1xf32>
    %25 = tpu.reciprocal %24 {approx = true} : vector<1x8x1xf32> -> vector<1x8x1xf32>
    %26 = vector.broadcast %25 : vector<1x8x1xf32> to vector<1x8x8xf32>
    %27 = arith.mulf %22, %26 : vector<1x8x8xf32>
    %28 = arith.truncf %27 : vector<1x8x8xf32> to vector<1x8x8xbf16>
    %cst_7 = arith.constant dense<0.000000e+00> : vector<1x8x16xf32>
    %29 = tpu.matmul %28, %14, %cst_7 {dimension_numbers = #tpu.dot_dimension_numbers<[2], [1], [1], [2], [0, 0, 0, 1, 1, 2], [0], [0]>} : vector<1x8x8xbf16>, vector<1x8x16xbf16>, vector<1x8x16xf32> -> vector<1x8x16xf32>
    %30 = vector.extract_strided_slice %4 {offsets = [0, 16], sizes = [8, 16], strides = [1, 1]} : vector<8x192xbf16> to vector<8x16xbf16>
    %31 = vector.shape_cast %30 : vector<8x16xbf16> to vector<1x8x16xbf16>
    %32 = vector.extract_strided_slice %4 {offsets = [0, 80], sizes = [8, 16], strides = [1, 1]} : vector<8x192xbf16> to vector<8x16xbf16>
    %33 = vector.shape_cast %32 : vector<8x16xbf16> to vector<1x8x16xbf16>
    %34 = vector.extract_strided_slice %4 {offsets = [0, 144], sizes = [8, 16], strides = [1, 1]} : vector<8x192xbf16> to vector<8x16xbf16>
    %35 = vector.shape_cast %34 : vector<8x16xbf16> to vector<1x8x16xbf16>
    %cst_8 = arith.constant dense<0.000000e+00> : vector<1x8x8xf32>
    %36 = tpu.matmul %31, %33, %cst_8 {dimension_numbers = #tpu.dot_dimension_numbers<[2], [2], [1], [1], [0, 0, 0, 1, 1, 1], [0], [0]>} : vector<1x8x16xbf16>, vector<1x8x16xbf16>, vector<1x8x8xf32> -> vector<1x8x8xf32>
    %cst_9 = arith.constant -1.000000e+30 : f32
    %37 = vector.broadcast %cst_9 : f32 to vector<1x8x8xf32>
    %38 = arith.select %8, %36, %37 : vector<1x8x8xi1>, vector<1x8x8xf32>
    %cst_10 = arith.constant dense<0xFF800000> : vector<1x8xf32>
    %39 = vector.multi_reduction <maximumf>, %38, %cst_10 [2] : vector<1x8x8xf32> to vector<1x8xf32>
    %40 = vector.shape_cast %39 : vector<1x8xf32> to vector<1x8x1xf32>
    %41 = vector.broadcast %40 : vector<1x8x1xf32> to vector<1x8x8xf32>
    %42 = arith.subf %38, %41 : vector<1x8x8xf32>
    %43 = math.exp %42 : vector<1x8x8xf32>
    %cst_11 = arith.constant dense<0.000000e+00> : vector<1x8xf32>
    %44 = vector.multi_reduction <add>, %43, %cst_11 [2] : vector<1x8x8xf32> to vector<1x8xf32>
    %45 = vector.shape_cast %44 : vector<1x8xf32> to vector<1x8x1xf32>
    %46 = tpu.reciprocal %45 {approx = true} : vector<1x8x1xf32> -> vector<1x8x1xf32>
    %47 = vector.broadcast %46 : vector<1x8x1xf32> to vector<1x8x8xf32>
    %48 = arith.mulf %43, %47 : vector<1x8x8xf32>
    %49 = arith.truncf %48 : vector<1x8x8xf32> to vector<1x8x8xbf16>
    %cst_12 = arith.constant dense<0.000000e+00> : vector<1x8x16xf32>
    %50 = tpu.matmul %49, %35, %cst_12 {dimension_numbers = #tpu.dot_dimension_numbers<[2], [1], [1], [2], [0, 0, 0, 1, 1, 2], [0], [0]>} : vector<1x8x8xbf16>, vector<1x8x16xbf16>, vector<1x8x16xf32> -> vector<1x8x16xf32>
    %51 = vector.extract_strided_slice %4 {offsets = [0, 32], sizes = [8, 16], strides = [1, 1]} : vector<8x192xbf16> to vector<8x16xbf16>
    %52 = vector.shape_cast %51 : vector<8x16xbf16> to vector<1x8x16xbf16>
    %53 = vector.extract_strided_slice %4 {offsets = [0, 96], sizes = [8, 16], strides = [1, 1]} : vector<8x192xbf16> to vector<8x16xbf16>
    %54 = vector.shape_cast %53 : vector<8x16xbf16> to vector<1x8x16xbf16>
    %55 = vector.extract_strided_slice %4 {offsets = [0, 160], sizes = [8, 16], strides = [1, 1]} : vector<8x192xbf16> to vector<8x16xbf16>
    %56 = vector.shape_cast %55 : vector<8x16xbf16> to vector<1x8x16xbf16>
    %cst_13 = arith.constant dense<0.000000e+00> : vector<1x8x8xf32>
    %57 = tpu.matmul %52, %54, %cst_13 {dimension_numbers = #tpu.dot_dimension_numbers<[2], [2], [1], [1], [0, 0, 0, 1, 1, 1], [0], [0]>} : vector<1x8x16xbf16>, vector<1x8x16xbf16>, vector<1x8x8xf32> -> vector<1x8x8xf32>
    %cst_14 = arith.constant -1.000000e+30 : f32
    %58 = vector.broadcast %cst_14 : f32 to vector<1x8x8xf32>
    %59 = arith.select %8, %57, %58 : vector<1x8x8xi1>, vector<1x8x8xf32>
    %cst_15 = arith.constant dense<0xFF800000> : vector<1x8xf32>
    %60 = vector.multi_reduction <maximumf>, %59, %cst_15 [2] : vector<1x8x8xf32> to vector<1x8xf32>
    %61 = vector.shape_cast %60 : vector<1x8xf32> to vector<1x8x1xf32>
    %62 = vector.broadcast %61 : vector<1x8x1xf32> to vector<1x8x8xf32>
    %63 = arith.subf %59, %62 : vector<1x8x8xf32>
    %64 = math.exp %63 : vector<1x8x8xf32>
    %cst_16 = arith.constant dense<0.000000e+00> : vector<1x8xf32>
    %65 = vector.multi_reduction <add>, %64, %cst_16 [2] : vector<1x8x8xf32> to vector<1x8xf32>
    %66 = vector.shape_cast %65 : vector<1x8xf32> to vector<1x8x1xf32>
    %67 = tpu.reciprocal %66 {approx = true} : vector<1x8x1xf32> -> vector<1x8x1xf32>
    %68 = vector.broadcast %67 : vector<1x8x1xf32> to vector<1x8x8xf32>
    %69 = arith.mulf %64, %68 : vector<1x8x8xf32>
    %70 = arith.truncf %69 : vector<1x8x8xf32> to vector<1x8x8xbf16>
    %cst_17 = arith.constant dense<0.000000e+00> : vector<1x8x16xf32>
    %71 = tpu.matmul %70, %56, %cst_17 {dimension_numbers = #tpu.dot_dimension_numbers<[2], [1], [1], [2], [0, 0, 0, 1, 1, 2], [0], [0]>} : vector<1x8x8xbf16>, vector<1x8x16xbf16>, vector<1x8x16xf32> -> vector<1x8x16xf32>
    %72 = vector.extract_strided_slice %4 {offsets = [0, 48], sizes = [8, 16], strides = [1, 1]} : vector<8x192xbf16> to vector<8x16xbf16>
    %73 = vector.shape_cast %72 : vector<8x16xbf16> to vector<1x8x16xbf16>
    %74 = vector.extract_strided_slice %4 {offsets = [0, 112], sizes = [8, 16], strides = [1, 1]} : vector<8x192xbf16> to vector<8x16xbf16>
    %75 = vector.shape_cast %74 : vector<8x16xbf16> to vector<1x8x16xbf16>
    %76 = vector.extract_strided_slice %4 {offsets = [0, 176], sizes = [8, 16], strides = [1, 1]} : vector<8x192xbf16> to vector<8x16xbf16>
    %77 = vector.shape_cast %76 : vector<8x16xbf16> to vector<1x8x16xbf16>
    %cst_18 = arith.constant dense<0.000000e+00> : vector<1x8x8xf32>
    %78 = tpu.matmul %73, %75, %cst_18 {dimension_numbers = #tpu.dot_dimension_numbers<[2], [2], [1], [1], [0, 0, 0, 1, 1, 1], [0], [0]>} : vector<1x8x16xbf16>, vector<1x8x16xbf16>, vector<1x8x8xf32> -> vector<1x8x8xf32>
    %cst_19 = arith.constant -1.000000e+30 : f32
    %79 = vector.broadcast %cst_19 : f32 to vector<1x8x8xf32>
    %80 = arith.select %8, %78, %79 : vector<1x8x8xi1>, vector<1x8x8xf32>
    %cst_20 = arith.constant dense<0xFF800000> : vector<1x8xf32>
    %81 = vector.multi_reduction <maximumf>, %80, %cst_20 [2] : vector<1x8x8xf32> to vector<1x8xf32>
    %82 = vector.shape_cast %81 : vector<1x8xf32> to vector<1x8x1xf32>
    %83 = vector.broadcast %82 : vector<1x8x1xf32> to vector<1x8x8xf32>
    %84 = arith.subf %80, %83 : vector<1x8x8xf32>
    %85 = math.exp %84 : vector<1x8x8xf32>
    %cst_21 = arith.constant dense<0.000000e+00> : vector<1x8xf32>
    %86 = vector.multi_reduction <add>, %85, %cst_21 [2] : vector<1x8x8xf32> to vector<1x8xf32>
    %87 = vector.shape_cast %86 : vector<1x8xf32> to vector<1x8x1xf32>
    %88 = tpu.reciprocal %87 {approx = true} : vector<1x8x1xf32> -> vector<1x8x1xf32>
    %89 = vector.broadcast %88 : vector<1x8x1xf32> to vector<1x8x8xf32>
    %90 = arith.mulf %85, %89 : vector<1x8x8xf32>
    %91 = arith.truncf %90 : vector<1x8x8xf32> to vector<1x8x8xbf16>
    %cst_22 = arith.constant dense<0.000000e+00> : vector<1x8x16xf32>
    %92 = tpu.matmul %91, %77, %cst_22 {dimension_numbers = #tpu.dot_dimension_numbers<[2], [1], [1], [2], [0, 0, 0, 1, 1, 2], [0], [0]>} : vector<1x8x8xbf16>, vector<1x8x16xbf16>, vector<1x8x16xf32> -> vector<1x8x16xf32>
    %93 = tpu.concatenate %29, %50, %71, %92 in 2 : vector<1x8x16xf32>, vector<1x8x16xf32>, vector<1x8x16xf32>, vector<1x8x16xf32> -> vector<1x8x64xf32>
    %94 = vector.shape_cast %93 : vector<1x8x64xf32> to vector<8x64xf32>
    %95 = arith.truncf %94 : vector<8x64xf32> to vector<8x64xbf16>
    %c0_23 = arith.constant 0 : index
    %c0_24 = arith.constant 0 : index
    %96 = vector.load %arg3[%c0_23, %c0_24] : memref<64x64xbf16, #tpu.memory_space<vmem>>, vector<64x64xbf16>
    %cst_25 = arith.constant dense<0.000000e+00> : vector<8x64xf32>
    %97 = tpu.matmul %95, %96, %cst_25 {dimension_numbers = #tpu.dot_dimension_numbers<[1], [0], [0], [1], [0, 0, 1, 1], [], []>} : vector<8x64xbf16>, vector<64x64xbf16>, vector<8x64xf32> -> vector<8x64xf32>
    %c0_26 = arith.constant 0 : index
    %c0_27 = arith.constant 0 : index
    %98 = vector.load %arg4[%c0_26, %c0_27] : memref<1x64xf32, #tpu.memory_space<vmem>>, vector<1x64xf32>
    %99 = vector.broadcast %98 : vector<1x64xf32> to vector<8x64xf32>
    %100 = arith.addf %97, %99 : vector<8x64xf32>
    %c0_28 = arith.constant 0 : index
    %c0_29 = arith.constant 0 : index
    %101 = vector.load %arg5[%c0_28, %c0_29] : memref<8x64xf32, #tpu.memory_space<vmem>>, vector<8x64xf32>
    tpu.vector_store %arg5[%c0_28, %c0_29], %100 {strides = array<i32>} : memref<8x64xf32, #tpu.memory_space<vmem>>, vector<8x64xf32>,
    return
  }
  func.func @transform_0(%arg0: i32) -> (i32, i32) {
    %c0_i32 = arith.constant 0 : i32
    %c0_i32_0 = arith.constant 0 : i32
    return %arg0, %c0_i32 : i32, i32
  }
  func.func @transform_1(%arg0: i32) -> (i32, i32) {
    %c0_i32 = arith.constant 0 : i32
    %c0_i32_0 = arith.constant 0 : i32
    %c0_i32_1 = arith.constant 0 : i32
    return %c0_i32, %c0_i32_0 : i32, i32
  }
  func.func @transform_2(%arg0: i32) -> (i32, i32) {
    %c0_i32 = arith.constant 0 : i32
    %c0_i32_0 = arith.constant 0 : i32
    %c0_i32_1 = arith.constant 0 : i32
    return %c0_i32, %c0_i32_0 : i32, i32
  }
  func.func @transform_3(%arg0: i32) -> (i32, i32) {
    %c0_i32 = arith.constant 0 : i32
    %c0_i32_0 = arith.constant 0 : i32
    %c0_i32_1 = arith.constant 0 : i32
    return %c0_i32, %c0_i32_0 : i32, i32
  }
  func.func @transform_4(%arg0: i32) -> (i32, i32) {
    %c0_i32 = arith.constant 0 : i32
    %c0_i32_0 = arith.constant 0 : i32
    return %arg0, %c0_i32 : i32, i32
  }
}

</mosaic_0001>

<llo_original>
// kernel: multi_head_attention.1
$region0: #{multi_head_attention.1}
  #allocation0 [shape = 'u32[]', space=smem, size = 0x4, offset = 0x4, fixed_abs, tag = 'smem constant byte address 0x4 - core index']
  #allocation1 [shape = 'u32[144,128]{1,0:T(1,128)}', space=vmem, size = 0x12000, scoped, tag = 'internal scratch']
  %s0 = inlined_call_operand.hbm [shape: f32[16,64], index: 0, kind: input, shape index: {}]
  %s1 = inlined_call_operand.hbm [shape: bf16[64,192], index: 1, kind: input, shape index: {}]
  %s2 = inlined_call_operand.hbm [shape: bf16[64,64], index: 2, kind: input, shape index: {}]
  %s3 = inlined_call_operand.vmem [shape: f32[1,64], index: 3, kind: input, shape index: {}]
  %s4 = inlined_call_operand.hbm [shape: f32[16,64], index: 4, kind: output, shape index: {}]
  %s5 = sld [smem:[#allocation0]]
  $region61: #{multi_head_attention.1} parent=0
    _
  %s7 = ssub.s32 1, %s5
  %s8 = scalar_select 0, %s7, %s5
  $region1: #{multi_head_attention.1} parent=0
    #allocation2 [shape = 'u8[8192]{0}', space=vmem, size = 0x2000, scoped, tag = 'input window, operand 0']
    #allocation3 [shape = 's32[2]{0}', space=sflag, size = 0x8, scoped, tag = 'scoped memory for multi_head_attention.1']
    #allocation4 [shape = 's32[2]{0}', space=sflag, size = 0x8, scoped, tag = 'scoped memory for multi_head_attention.1']
    #allocation5 [shape = 'u8[32768]{0}', space=vmem, size = 0x8000, scoped, tag = 'input window, operand 1, single buffered']
    #allocation6 [shape = 's32[1]{0}', space=sflag, size = 0x4, scoped, tag = 'scoped memory for multi_head_attention.1']
    #allocation7 [shape = 'u8[16384]{0}', space=vmem, size = 0x4000, scoped, tag = 'input window, operand 2, single buffered']
    #allocation8 [shape = 'u8[8192]{0}', space=vmem, size = 0x2000, scoped, tag = 'output window, operand 0']
    %9 = vsyncpa [#allocation3], 0
    %s10 = scalar_lea.sflag [#allocation3], 1
    %11 = vsyncpa %s10, 0
    %12 = vsyncpa [#allocation6], 0
    %13 = vsyncpa [#allocation4], 0
    %s14 = scalar_lea.sflag [#allocation4], 1
    %15 = vsyncpa %s14, 0
    loop: start=0, step=1, limit=4
    $region2: #{multi_head_attention.1} parent=1 // loop_pre_header
      _
    $region3: #{multi_head_attention.1} parent=1 // loop_header
      %s17 = sphi 0, %s21
      %p18 = scmp.ge.s32.totalorder %s17, 4
      %s27 = sphi 0, %s29
      %s30 = sphi 0, %s27
      %s31 = sphi 0, %s30
      %s47 = sphi 0, %s31
      %s51 = sphi 0, %s51
      %s53 = sphi 0, %s51
      %s54 = sphi 0, %s53
      %s68 = sphi 0, %s54
      %s72 = sphi 0, %s72
      %s74 = sphi 0, %s72
      %s75 = sphi 0, %s74
      %s89 = sphi 0, %s75
      %s93 = sphi 0, %s93
      %s95 = sphi 0, %s93
      %s96 = sphi 0, %s95
      %s110 = sphi 0, %s96
      %s116 = sphi 0, %s118
      %s119 = sphi 0, %s116
      %s120 = sphi 0, %s119
      %s136 = sphi 0, %s120
    $region4: #{multi_head_attention.1} parent=1 // loop_header_branch
      %20 = sbr.rel (%p18) target = $region8
    $region5: #{multi_head_attention.1} parent=1 // loop_body
      %s22 = ssub.s32 %s17, 1
      %s23 = ssub.s32 %s17, 2
      %s24 = sadd.s32 %s17, 1
      %s25 = ssub.s32 %s17, %s24
      %p26 = scmp.eq.s32.totalorder %s25, 0
      %s28 = sadd.s32 %s27, 1
      %s29 = scalar_select %p26, %s27, %s28
      %p32 = pneg %p26
      %p33 = scmp.eq.s32.totalorder %s17, 1
      %p34 = por %p32, %p33
      %p35 = scmp.ne.s32.totalorder %s27, %s30
      %p36 = scmp.eq.s32.totalorder %s17, 0
      %p37 = por %p35, %p36
      %p38 = scmp.ne.s32.totalorder %s27, %s30
      %p39 = scmp.eq.s32.totalorder %s22, 1
      %p40 = por %p38, %p39
      %p41 = scmp.ne.s32.totalorder %s30, %s31
      %p42 = scmp.eq.s32.totalorder %s22, 0
      %p43 = por %p41, %p42
      %p44 = scmp.ne.s32.totalorder %s30, %s31
      %p45 = scmp.eq.s32.totalorder %s23, 1
      %p46 = por %p44, %p45
      %p48 = scmp.ne.s32.totalorder %s31, %s47
      %p49 = scmp.eq.s32.totalorder %s23, 0
      %p50 = por %p48, %p49
      %s52 = sadd.s32 %s51, 1
      %p55 = scmp.eq.s32.totalorder %s17, 1
      %p56 = scmp.ne.s32.totalorder %s51, %s53
      %p57 = scmp.eq.s32.totalorder %s17, 0
      %p58 = por %p56, %p57
      %p59 = scmp.ne.s32.totalorder %s51, %s53
      %p60 = scmp.eq.s32.totalorder %s22, 1
      %p61 = por %p59, %p60
      %p62 = scmp.ne.s32.totalorder %s53, %s54
      %p63 = scmp.eq.s32.totalorder %s22, 0
      %p64 = por %p62, %p63
      %p65 = scmp.ne.s32.totalorder %s53, %s54
      %p66 = scmp.eq.s32.totalorder %s23, 1
      %p67 = por %p65, %p66
      %p69 = scmp.ne.s32.totalorder %s54, %s68
      %p70 = scmp.eq.s32.totalorder %s23, 0
      %p71 = por %p69, %p70
      %s73 = sadd.s32 %s72, 1
      %p76 = scmp.eq.s32.totalorder %s17, 1
      %p77 = scmp.ne.s32.totalorder %s72, %s74
      %p78 = scmp.eq.s32.totalorder %s17, 0
      %p79 = por %p77, %p78
      %p80 = scmp.ne.s32.totalorder %s72, %s74
      %p81 = scmp.eq.s32.totalorder %s22, 1
      %p82 = por %p80, %p81
      %p83 = scmp.ne.s32.totalorder %s74, %s75
      %p84 = scmp.eq.s32.totalorder %s22, 0
      %p85 = por %p83, %p84
      %p86 = scmp.ne.s32.totalorder %s74, %s75
      %p87 = scmp.eq.s32.totalorder %s23, 1
      %p88 = por %p86, %p87
      %p90 = scmp.ne.s32.totalorder %s75, %s89
      %p91 = scmp.eq.s32.totalorder %s23, 0
      %p92 = por %p90, %p91
      %s94 = sadd.s32 %s93, 1
      %p97 = scmp.eq.s32.totalorder %s17, 1
      %p98 = scmp.ne.s32.totalorder %s93, %s95
      %p99 = scmp.eq.s32.totalorder %s17, 0
      %p100 = por %p98, %p99
      %p101 = scmp.ne.s32.totalorder %s93, %s95
      %p102 = scmp.eq.s32.totalorder %s22, 1
      %p103 = por %p101, %p102
      %p104 = scmp.ne.s32.totalorder %s95, %s96
      %p105 = scmp.eq.s32.totalorder %s22, 0
      %p106 = por %p104, %p105
      %p107 = scmp.ne.s32.totalorder %s95, %s96
      %p108 = scmp.eq.s32.totalorder %s23, 1
      %p109 = por %p107, %p108
      %p111 = scmp.ne.s32.totalorder %s96, %s110
      %p112 = scmp.eq.s32.totalorder %s23, 0
      %p113 = por %p111, %p112
      %s114 = ssub.s32 %s17, %s24
      %p115 = scmp.eq.s32.totalorder %s114, 0
      %s117 = sadd.s32 %s116, 1
      %s118 = scalar_select %p115, %s116, %s117
      %p121 = pneg %p115
      %p122 = scmp.eq.s32.totalorder %s17, 1
      %p123 = por %p121, %p122
      %p124 = scmp.ne.s32.totalorder %s116, %s119
      %p125 = scmp.eq.s32.totalorder %s17, 0
      %p126 = por %p124, %p125
      %p127 = scmp.ne.s32.totalorder %s116, %s119
      %p128 = scmp.eq.s32.totalorder %s22, 1
      %p129 = por %p127, %p128
      %p130 = scmp.ne.s32.totalorder %s119, %s120
      %p131 = scmp.eq.s32.totalorder %s22, 0
      %p132 = por %p130, %p131
      %p133 = scmp.ne.s32.totalorder %s119, %s120
      %p134 = scmp.eq.s32.totalorder %s23, 1
      %p135 = por %p133, %p134
      %p137 = scmp.ne.s32.totalorder %s120, %s136
      %p138 = scmp.eq.s32.totalorder %s23, 0
      %p139 = por %p137, %p138
      %p140 = scmp.le.s32.totalorder 1, %s17
      %p141 = scmp.lt.s32.totalorder %s17, 3
      %p142 = pnand %p140, %p141
      %p143 = pneg %p142
      // Predicated region
      $region9: #{multi_head_attention.1} parent=5 // pred_check
        _
      $region10: #{multi_head_attention.1} parent=5 // pred_check_branch
        %145 = sbr.rel (%p142) target = $region12
      $region11: #{multi_head_attention.1} parent=5 // pred_region
        %s146 = ssub.s32 %s17, 1
        // Predicated region
        $region13: #{multi_head_attention.1} parent=11 // pred_check
          %p147 = pneg %p64
        $region14: #{multi_head_attention.1} parent=11 // pred_check_branch
          %149 = sbr.rel (%p147) target = $region16
        $region15: #{multi_head_attention.1} parent=11 // pred_region
          %s151 = ssub.s32 1024, 1024
          %152 = vsyncadd [#allocation6], %s151
          %s153 = sshll.u32 [#allocation5], 4
          %s154 = int_to_ptr.vmem [resolvable:$true] %s153
          %159 = dma.hbm_to_vmem [thread:$0]  %s1, 1024, %s154, [#allocation6], 128, 128, 8
        $region16: #{multi_head_attention.1} parent=11 // pred_fallthru
          _
        // Predicated region
        $region17: #{multi_head_attention.1} parent=11 // pred_check
          %p160 = pneg %p85
        $region18: #{multi_head_attention.1} parent=11 // pred_check_branch
          %162 = sbr.rel (%p160) target = $region20
        $region19: #{multi_head_attention.1} parent=11 // pred_region
          %s164 = ssub.s32 512, 512
          %165 = vsyncadd [#allocation6], %s164
          %s166 = sshll.u32 [#allocation7], 4
          %s167 = int_to_ptr.vmem [resolvable:$true] %s166
          %172 = dma.hbm_to_vmem [thread:$0]  %s2, 512, %s167, [#allocation6], 64, 64, 4
        $region20: #{multi_head_attention.1} parent=11 // pred_fallthru
          _
        // Predicated region
        $region21: #{multi_head_attention.1} parent=11 // pred_check
          %p173 = pneg %p106
        $region22: #{multi_head_attention.1} parent=11 // pred_check_branch
          %175 = sbr.rel (%p173) target = $region24
        $region23: #{multi_head_attention.1} parent=11 // pred_region
          _
        $region24: #{multi_head_attention.1} parent=11 // pred_fallthru
          _
      $region12: #{multi_head_attention.1} parent=5 // pred_fallthru
        _
      %p176 = scmp.lt.s32.totalorder %s17, 2
      // Predicated region
      $region25: #{multi_head_attention.1} parent=5 // pred_check
        %p177 = pneg %p176
      $region26: #{multi_head_attention.1} parent=5 // pred_check_branch
        %179 = sbr.rel (%p177) target = $region28
      $region27: #{multi_head_attention.1} parent=5 // pred_region
        // Predicated region
        $region29: #{multi_head_attention.1} parent=27 // pred_check
          %p180 = pneg %p37
        $region30: #{multi_head_attention.1} parent=27 // pred_check_branch
          %182 = sbr.rel (%p180) target = $region32
        $region31: #{multi_head_attention.1} parent=27 // pred_region
          %s183 = sand.u32 %s27, 1
          %s184 = scalar_lea.sflag [#allocation3], %s183
          %s185 = sand.u32 %s27, 1
          %s186 = smul.addr %s185, 8
          %s187 = scalar_lea.vmem [#allocation2], %s186
          %s189 = ssub.s32 128, 128
          %190 = vsyncadd %s184, %s189
          %s191 = smul.addr %s17, 128
          %s192 = scalar_lea.hbm %s0, %s191
          %s194 = sshll.u32 %s187, 4
          %s195 = int_to_ptr.vmem [resolvable:$true] %s194
          %197 = dma.hbm_to_vmem [thread:$0]  %s192, 128, %s195, %s184
        $region32: #{multi_head_attention.1} parent=27 // pred_fallthru
          _
      $region28: #{multi_head_attention.1} parent=5 // pred_fallthru
        _
      %p198 = scmp.le.s32.totalorder 1, %s17
      %p199 = scmp.lt.s32.totalorder %s17, 3
      %p200 = pnand %p198, %p199
      %p201 = pneg %p200
      // Predicated region
      $region33: #{multi_head_attention.1} parent=5 // pred_check
        _
      $region34: #{multi_head_attention.1} parent=5 // pred_check_branch
        %203 = sbr.rel (%p200) target = $region36
      $region35: #{multi_head_attention.1} parent=5 // pred_region
        %s204 = ssub.s32 %s17, 1
        %s205 = sand.u32 %s30, 1
        %s206 = scalar_lea.sflag [#allocation3], %s205
        %s207 = sand.u32 %s30, 1
        %s208 = smul.addr %s207, 8
        %s209 = scalar_lea.vmem [#allocation2], %s208
        // Predicated region
        $region37: #{multi_head_attention.1} parent=35 // pred_check
          %p210 = pneg %p43
        $region38: #{multi_head_attention.1} parent=35 // pred_check_branch
          %212 = sbr.rel (%p210) target = $region40
        $region39: #{multi_head_attention.1} parent=35 // pred_region
          %213 = dma.done %s206, 128
        $region40: #{multi_head_attention.1} parent=35 // pred_fallthru
          _
        // Predicated region
        $region41: #{multi_head_attention.1} parent=35 // pred_check
          %p214 = pneg %p64
        $region42: #{multi_head_attention.1} parent=35 // pred_check_branch
          %216 = sbr.rel (%p214) target = $region44
        $region43: #{multi_head_attention.1} parent=35 // pred_region
          %217 = dma.done [#allocation6], 1024
        $region44: #{multi_head_attention.1} parent=35 // pred_fallthru
          _
        // Predicated region
        $region45: #{multi_head_attention.1} parent=35 // pred_check
          %p218 = pneg %p85
        $region46: #{multi_head_attention.1} parent=35 // pred_check_branch
          %220 = sbr.rel (%p218) target = $region48
        $region47: #{multi_head_attention.1} parent=35 // pred_region
          %221 = dma.done [#allocation6], 512
        $region48: #{multi_head_attention.1} parent=35 // pred_fallthru
          _
        %s222 = sand.u32 %s30, 1
        %s223 = scalar_lea.sflag [#allocation3], %s222
        %s224 = sand.u32 %s30, 1
        %s225 = smul.addr %s224, 8
        %s226 = scalar_lea.vmem [#allocation2], %s225
        %p227 = pneg %p43
        %p228 = pneg %p40
        %p229 = pneg %p64
        %p230 = pneg %p61
        %p231 = pneg %p85
        %p232 = pneg %p82
        %p233 = pneg %p106
        %p234 = pneg %p103
        %p235 = pneg %p132
        %p236 = pneg %p129
        %s237 = sand.u32 %s119, 1
        %s238 = scalar_lea.sflag [#allocation4], %s237
        %s239 = sand.u32 %s119, 1
        %s240 = smul.addr %s239, 8
        %s241 = scalar_lea.vmem [#allocation8], %s240
        %v243 = vld [vmem:[%s209] sm:$0xff]
        %v244 = vpack.c.bf16 %v243, %v243
        %v245 = vld [vmem:[#allocation5] sm:$0xff]
        %v246 = vld [vmem:[#allocation5 + $0x8] sm:$0xff]
        %v247 = vld [vmem:[#allocation5 + $0x10] sm:$0xff]
        %v248 = vld [vmem:[#allocation5 + $0x18] sm:$0xff]
        %v249 = vld [vmem:[#allocation5 + $0x20] sm:$0xff]
        %v250 = vld [vmem:[#allocation5 + $0x28] sm:$0xff]
        %v251 = vld [vmem:[#allocation5 + $0x30] sm:$0xff]
        %v252 = vld [vmem:[#allocation5 + $0x38] sm:$0xff]
        %v261 = vunpack.c.l.b16 %v245
        %v262 = vunpack.c.h.b16 %v245
        %v263 = vunpack.c.l.b16 %v246
        %v264 = vunpack.c.h.b16 %v246
        %v265 = vunpack.c.l.b16 %v247
        %v266 = vunpack.c.h.b16 %v247
        %v267 = vunpack.c.l.b16 %v248
        %v268 = vunpack.c.h.b16 %v248
        %v269 = vunpack.c.l.b16 %v249
        %v270 = vunpack.c.h.b16 %v249
        %v271 = vunpack.c.l.b16 %v250
        %v272 = vunpack.c.h.b16 %v250
        %v273 = vunpack.c.l.b16 %v251
        %v274 = vunpack.c.h.b16 %v251
        %v275 = vunpack.c.l.b16 %v252
        %v276 = vunpack.c.h.b16 %v252
        %v277 = vpack.c.b16 %v263, %v261
        %v278 = vpack.c.b16 %v264, %v262
        %v279 = vpack.c.b16 %v267, %v265
        %v280 = vpack.c.b16 %v268, %v266
        %v281 = vpack.c.b16 %v271, %v269
        %v282 = vpack.c.b16 %v272, %v270
        %v283 = vpack.c.b16 %v275, %v273
        %v284 = vpack.c.b16 %v276, %v274
        %vm293 = vcmask 523264
        %v295 = vsel %vm293, %v244, 0
        %297 = vmatprep.subr.bf16.mxu0 %v278
        %298 = vmatpush1.bf16.msra.mxu0 %v277
        %299 = vmatprep.subr.bf16.mxu0 %v280
        %300 = vmatpush1.bf16.msra.mxu0 %v279
        %301 = vmatprep.subr.bf16.mxu0 %v282
        %302 = vmatpush1.bf16.msra.mxu0 %v281
        %303 = vmatprep.subr.bf16.mxu0 %v284
        %304 = vmatpush1.bf16.msra.mxu0 %v283
        %305 = vmatprep.subr.bf16.mxu0 0
        %306 = vmatpush1.bf16.msra.mxu0 0
        %307 = vmatprep.subr.bf16.mxu0 0
        %308 = vmatpush1.bf16.msra.mxu0 0
        %309 = vmatprep.subr.bf16.mxu0 0
        %310 = vmatpush1.bf16.msra.mxu0 0
        %311 = vmatprep.subr.bf16.mxu0 0
        %312 = vmatpush1.bf16.msra.mxu0 0
        %313 = vmatprep.subr.bf16.mxu0 0
        %314 = vmatpush1.bf16.msra.mxu0 0
        %315 = vmatprep.subr.bf16.mxu0 0
        %316 = vmatpush1.bf16.msra.mxu0 0
        %317 = vmatprep.subr.bf16.mxu0 0
        %318 = vmatpush1.bf16.msra.mxu0 0
        %319 = vmatprep.subr.bf16.mxu0 0
        %320 = vmatpush1.bf16.msra.mxu0 0
        %321 = vmatprep.subr.bf16.mxu0 0
        %322 = vmatpush1.bf16.msra.mxu0 0
        %323 = vmatprep.subr.bf16.mxu0 0
        %324 = vmatpush1.bf16.msra.mxu0 0
        %325 = vmatprep.subr.bf16.mxu0 0
        %326 = vmatpush1.bf16.msra.mxu0 0
        %327 = vmatprep.subr.bf16.mxu0 0
        %328 = vmatpush1.bf16.msra.mxu0 0
        %329 = vmatprep.mubr.bf16.mxu0 0
        %330 = vmatmul.mubr.bf16.gmra.mrb[0].mxu0 %v295
        %v331 = vpop.f32.mrb[0].mxu0
        %v332 = vadd.f32 0.0, %v331
        %v333 = vpop.f32.mrb[0].mxu0
        %v334 = vadd.f32 0.0, %v333
        %v335 = vpop.f32.mrb[0].mxu0
        %v336 = vpop.f32.mrb[0].mxu0
        %337 = vdwg.mxu0
        %v338 = vpack.c.bf16 %v332, %v332
        %v339 = vpack.c.bf16 %v334, %v334
        %v340 = vlaneseq
        %v341 = vshrl.u32 %v340, 7
        %v342 = vlaneseq
        %v343 = vand.u32 %v342, 127
        %vm344 = vcmp.le.s32.totalorder %v343, %v341
        %346 = vrot.lane.b32.xlu0 %v338, 64
        %v347 = vpop.permute.xlu0 %346
        %vm348 = vcmask 130048
        %v350 = vsel %vm348, %v338, 0
        %v353 = vsel %vm348, %v347, 0
        %355 = vmatprep.subr.bf16.mxu0 0
        %356 = vmatpush1.bf16.xpose.msra.mxu0 %v353
        %357 = vmatprep.subr.bf16.mxu0 0
        %358 = vmatpush1.bf16.xpose.msra.mxu0 0
        %359 = vmatprep.subr.bf16.mxu0 0
        %360 = vmatpush1.bf16.xpose.msra.mxu0 0
        %361 = vmatprep.subr.bf16.mxu0 0
        %362 = vmatpush1.bf16.xpose.msra.mxu0 0
        %363 = vmatprep.subr.bf16.mxu0 0
        %364 = vmatpush1.bf16.xpose.msra.mxu0 0
        %365 = vmatprep.subr.bf16.mxu0 0
        %366 = vmatpush1.bf16.xpose.msra.mxu0 0
        %367 = vmatprep.subr.bf16.mxu0 0
        %368 = vmatpush1.bf16.xpose.msra.mxu0 0
        %369 = vmatprep.subr.bf16.mxu0 0
        %370 = vmatpush1.bf16.xpose.msra.mxu0 0
        %371 = vmatprep.subr.bf16.mxu0 0
        %372 = vmatpush1.bf16.xpose.msra.mxu0 0
        %373 = vmatprep.subr.bf16.mxu0 0
        %374 = vmatpush1.bf16.xpose.msra.mxu0 0
        %375 = vmatprep.subr.bf16.mxu0 0
        %376 = vmatpush1.bf16.xpose.msra.mxu0 0
        %377 = vmatprep.subr.bf16.mxu0 0
        %378 = vmatpush1.bf16.xpose.msra.mxu0 0
        %379 = vmatprep.subr.bf16.mxu0 0
        %380 = vmatpush1.bf16.xpose.msra.mxu0 0
        %381 = vmatprep.subr.bf16.mxu0 0
        %382 = vmatpush1.bf16.xpose.msra.mxu0 0
        %383 = vmatprep.subr.bf16.mxu0 0
        %384 = vmatpush1.bf16.xpose.msra.mxu0 0
        %385 = vmatprep.subr.bf16.mxu0 0
        %386 = vmatpush1.bf16.xpose.msra.mxu0 0
        %387 = vmatprep.mubr.bf16.mxu0 0
        %388 = vmatmul.mubr.bf16.gmra.mrb[0].mxu0 %v350
        %v389 = vpop.f32.mrb[0].mxu0
        %v390 = vadd.f32 0.0, %v389
        %v391 = vpop.f32.mrb[0].mxu0
        %v392 = vpop.f32.mrb[0].mxu0
        %v393 = vpop.f32.mrb[0].mxu0
        %394 = vdwg.mxu0
        %v395 = vsel %vm344, %v390, -1e+30
        %vm396 = vcmask 64512
        %v397 = vsel %vm396, %v395, -inf
        %398 = vmax.xlane.f32.xlu0 %v397
        %v399 = vpop.xlane.xlu0 %398
        %v400 = vsub.f32 %v395, %v399
        %v401 = vmul.f32 %v400, 1.442695
        %v402 = vpow.pop %v401
        %v403 = vsel %vm396, %v402, 0.0
        %404 = vadd.xlane.f32.xlu0 %v403
        %v405 = vpop.xlane.xlu0 %404
        %v406 = vrcp.pop %v405
        %v407 = vmul.f32 %v402, %v406
        %v408 = vpack.c.bf16 %v407, %v407
        %v410 = vsel %vm396, %v408, 0
        %vm412 = vcmask 1043456
        %v414 = vsel %vm412, %v339, 0
        %416 = vmatprep.subr.bf16.mxu0 0
        %417 = vmatpush1.bf16.msra.mxu0 %v414
        %418 = vmatprep.subr.bf16.mxu0 0
        %419 = vmatpush1.bf16.msra.mxu0 0
        %420 = vmatprep.subr.bf16.mxu0 0
        %421 = vmatpush1.bf16.msra.mxu0 0
        %422 = vmatprep.subr.bf16.mxu0 0
        %423 = vmatpush1.bf16.msra.mxu0 0
        %424 = vmatprep.subr.bf16.mxu0 0
        %425 = vmatpush1.bf16.msra.mxu0 0
        %426 = vmatprep.subr.bf16.mxu0 0
        %427 = vmatpush1.bf16.msra.mxu0 0
        %428 = vmatprep.subr.bf16.mxu0 0
        %429 = vmatpush1.bf16.msra.mxu0 0
        %430 = vmatprep.subr.bf16.mxu0 0
        %431 = vmatpush1.bf16.msra.mxu0 0
        %432 = vmatprep.subr.bf16.mxu0 0
        %433 = vmatpush1.bf16.msra.mxu0 0
        %434 = vmatprep.subr.bf16.mxu0 0
        %435 = vmatpush1.bf16.msra.mxu0 0
        %436 = vmatprep.subr.bf16.mxu0 0
        %437 = vmatpush1.bf16.msra.mxu0 0
        %438 = vmatprep.subr.bf16.mxu0 0
        %439 = vmatpush1.bf16.msra.mxu0 0
        %440 = vmatprep.subr.bf16.mxu0 0
        %441 = vmatpush1.bf16.msra.mxu0 0
        %442 = vmatprep.subr.bf16.mxu0 0
        %443 = vmatpush1.bf16.msra.mxu0 0
        %444 = vmatprep.subr.bf16.mxu0 0
        %445 = vmatpush1.bf16.msra.mxu0 0
        %446 = vmatprep.subr.bf16.mxu0 0
        %447 = vmatpush1.bf16.msra.mxu0 0
        %448 = vmatprep.mubr.bf16.mxu0 0
        %449 = vmatmul.mubr.bf16.gmra.mrb[0].mxu0 %v410
        %v450 = vpop.f32.mrb[0].mxu0
        %v451 = vadd.f32 0.0, %v450
        %v452 = vpop.f32.mrb[0].mxu0
        %v453 = vpop.f32.mrb[0].mxu0
        %v454 = vpop.f32.mrb[0].mxu0
        %455 = vdwg.mxu0
        %456 = vrot.lane.b32.xlu0 %v338, 112
        %v457 = vpop.permute.xlu0 %456
        %458 = vrot.lane.b32.xlu0 %v338, 48
        %v459 = vpop.permute.xlu0 %458
        %v461 = vsel %vm348, %v457, 0
        %v464 = vsel %vm348, %v459, 0
        %466 = vmatprep.subr.bf16.mxu0 0
        %467 = vmatpush1.bf16.xpose.msra.mxu0 %v464
        %468 = vmatprep.subr.bf16.mxu0 0
        %469 = vmatpush1.bf16.xpose.msra.mxu0 0
        %470 = vmatprep.subr.bf16.mxu0 0
        %471 = vmatpush1.bf16.xpose.msra.mxu0 0
        %472 = vmatprep.subr.bf16.mxu0 0
        %473 = vmatpush1.bf16.xpose.msra.mxu0 0
        %474 = vmatprep.subr.bf16.mxu0 0
        %475 = vmatpush1.bf16.xpose.msra.mxu0 0
        %476 = vmatprep.subr.bf16.mxu0 0
        %477 = vmatpush1.bf16.xpose.msra.mxu0 0
        %478 = vmatprep.subr.bf16.mxu0 0
        %479 = vmatpush1.bf16.xpose.msra.mxu0 0
        %480 = vmatprep.subr.bf16.mxu0 0
        %481 = vmatpush1.bf16.xpose.msra.mxu0 0
        %482 = vmatprep.subr.bf16.mxu0 0
        %483 = vmatpush1.bf16.xpose.msra.mxu0 0
        %484 = vmatprep.subr.bf16.mxu0 0
        %485 = vmatpush1.bf16.xpose.msra.mxu0 0
        %486 = vmatprep.subr.bf16.mxu0 0
        %487 = vmatpush1.bf16.xpose.msra.mxu0 0
        %488 = vmatprep.subr.bf16.mxu0 0
        %489 = vmatpush1.bf16.xpose.msra.mxu0 0
        %490 = vmatprep.subr.bf16.mxu0 0
        %491 = vmatpush1.bf16.xpose.msra.mxu0 0
        %492 = vmatprep.subr.bf16.mxu0 0
        %493 = vmatpush1.bf16.xpose.msra.mxu0 0
        %494 = vmatprep.subr.bf16.mxu0 0
        %495 = vmatpush1.bf16.xpose.msra.mxu0 0
        %496 = vmatprep.subr.bf16.mxu0 0
        %497 = vmatpush1.bf16.xpose.msra.mxu0 0
        %498 = vmatprep.mubr.bf16.mxu0 0
        %499 = vmatmul.mubr.bf16.gmra.mrb[0].mxu0 %v461
        %v500 = vpop.f32.mrb[0].mxu0
        %v501 = vadd.f32 0.0, %v500
        %v502 = vpop.f32.mrb[0].mxu0
        %v503 = vpop.f32.mrb[0].mxu0
        %v504 = vpop.f32.mrb[0].mxu0
        %505 = vdwg.mxu0
        %v506 = vsel %vm344, %v501, -1e+30
        %v507 = vsel %vm396, %v506, -inf
        %508 = vmax.xlane.f32.xlu0 %v507
        %v509 = vpop.xlane.xlu0 %508
        %v510 = vsub.f32 %v506, %v509
        %v511 = vmul.f32 %v510, 1.442695
        %v512 = vpow.pop %v511
        %v513 = vsel %vm396, %v512, 0.0
        %514 = vadd.xlane.f32.xlu0 %v513
        %v515 = vpop.xlane.xlu0 %514
        %v516 = vrcp.pop %v515
        %v517 = vmul.f32 %v512, %v516
        %v518 = vpack.c.bf16 %v517, %v517
        %520 = vrot.lane.b32.xlu0 %v339, 112
        %v521 = vpop.permute.xlu0 %520
        %v523 = vsel %vm396, %v518, 0
        %v526 = vsel %vm412, %v521, 0
        %528 = vmatprep.subr.bf16.mxu0 0
        %529 = vmatpush1.bf16.msra.mxu0 %v526
        %530 = vmatprep.subr.bf16.mxu0 0
        %531 = vmatpush1.bf16.msra.mxu0 0
        %532 = vmatprep.subr.bf16.mxu0 0
        %533 = vmatpush1.bf16.msra.mxu0 0
        %534 = vmatprep.subr.bf16.mxu0 0
        %535 = vmatpush1.bf16.msra.mxu0 0
        %536 = vmatprep.subr.bf16.mxu0 0
        %537 = vmatpush1.bf16.msra.mxu0 0
        %538 = vmatprep.subr.bf16.mxu0 0
        %539 = vmatpush1.bf16.msra.mxu0 0
        %540 = vmatprep.subr.bf16.mxu0 0
        %541 = vmatpush1.bf16.msra.mxu0 0
        %542 = vmatprep.subr.bf16.mxu0 0
        %543 = vmatpush1.bf16.msra.mxu0 0
        %544 = vmatprep.subr.bf16.mxu0 0
        %545 = vmatpush1.bf16.msra.mxu0 0
        %546 = vmatprep.subr.bf16.mxu0 0
        %547 = vmatpush1.bf16.msra.mxu0 0
        %548 = vmatprep.subr.bf16.mxu0 0
        %549 = vmatpush1.bf16.msra.mxu0 0
        %550 = vmatprep.subr.bf16.mxu0 0
        %551 = vmatpush1.bf16.msra.mxu0 0
        %552 = vmatprep.subr.bf16.mxu0 0
        %553 = vmatpush1.bf16.msra.mxu0 0
        %554 = vmatprep.subr.bf16.mxu0 0
        %555 = vmatpush1.bf16.msra.mxu0 0
        %556 = vmatprep.subr.bf16.mxu0 0
        %557 = vmatpush1.bf16.msra.mxu0 0
        %558 = vmatprep.subr.bf16.mxu0 0
        %559 = vmatpush1.bf16.msra.mxu0 0
        %560 = vmatprep.mubr.bf16.mxu0 0
        %561 = vmatmul.mubr.bf16.gmra.mrb[0].mxu0 %v523
        %v562 = vpop.f32.mrb[0].mxu0
        %v563 = vadd.f32 0.0, %v562
        %v564 = vpop.f32.mrb[0].mxu0
        %v565 = vpop.f32.mrb[0].mxu0
        %v566 = vpop.f32.mrb[0].mxu0
        %567 = vdwg.mxu0
        %568 = vrot.lane.b32.xlu0 %v338, 96
        %v569 = vpop.permute.xlu0 %568
        %570 = vrot.lane.b32.xlu0 %v338, 32
        %v571 = vpop.permute.xlu0 %570
        %v573 = vsel %vm348, %v569, 0
        %v576 = vsel %vm348, %v571, 0
        %578 = vmatprep.subr.bf16.mxu0 0
        %579 = vmatpush1.bf16.xpose.msra.mxu0 %v576
        %580 = vmatprep.subr.bf16.mxu0 0
        %581 = vmatpush1.bf16.xpose.msra.mxu0 0
        %582 = vmatprep.subr.bf16.mxu0 0
        %583 = vmatpush1.bf16.xpose.msra.mxu0 0
        %584 = vmatprep.subr.bf16.mxu0 0
        %585 = vmatpush1.bf16.xpose.msra.mxu0 0
        %586 = vmatprep.subr.bf16.mxu0 0
        %587 = vmatpush1.bf16.xpose.msra.mxu0 0
        %588 = vmatprep.subr.bf16.mxu0 0
        %589 = vmatpush1.bf16.xpose.msra.mxu0 0
        %590 = vmatprep.subr.bf16.mxu0 0
        %591 = vmatpush1.bf16.xpose.msra.mxu0 0
        %592 = vmatprep.subr.bf16.mxu0 0
        %593 = vmatpush1.bf16.xpose.msra.mxu0 0
        %594 = vmatprep.subr.bf16.mxu0 0
        %595 = vmatpush1.bf16.xpose.msra.mxu0 0
        %596 = vmatprep.subr.bf16.mxu0 0
        %597 = vmatpush1.bf16.xpose.msra.mxu0 0
        %598 = vmatprep.subr.bf16.mxu0 0
        %599 = vmatpush1.bf16.xpose.msra.mxu0 0
        %600 = vmatprep.subr.bf16.mxu0 0
        %601 = vmatpush1.bf16.xpose.msra.mxu0 0
        %602 = vmatprep.subr.bf16.mxu0 0
        %603 = vmatpush1.bf16.xpose.msra.mxu0 0
        %604 = vmatprep.subr.bf16.mxu0 0
        %605 = vmatpush1.bf16.xpose.msra.mxu0 0
        %606 = vmatprep.subr.bf16.mxu0 0
        %607 = vmatpush1.bf16.xpose.msra.mxu0 0
        %608 = vmatprep.subr.bf16.mxu0 0
        %609 = vmatpush1.bf16.xpose.msra.mxu0 0
        %610 = vmatprep.mubr.bf16.mxu0 0
        %611 = vmatmul.mubr.bf16.gmra.mrb[0].mxu0 %v573
        %v612 = vpop.f32.mrb[0].mxu0
        %v613 = vadd.f32 0.0, %v612
        %v614 = vpop.f32.mrb[0].mxu0
        %v615 = vpop.f32.mrb[0].mxu0
        %v616 = vpop.f32.mrb[0].mxu0
        %617 = vdwg.mxu0
        %v618 = vsel %vm344, %v613, -1e+30
        %v619 = vsel %vm396, %v618, -inf
        %620 = vmax.xlane.f32.xlu0 %v619
        %v621 = vpop.xlane.xlu0 %620
        %v622 = vsub.f32 %v618, %v621
        %v623 = vmul.f32 %v622, 1.442695
        %v624 = vpow.pop %v623
        %v625 = vsel %vm396, %v624, 0.0
        %626 = vadd.xlane.f32.xlu0 %v625
        %v627 = vpop.xlane.xlu0 %626
        %v628 = vrcp.pop %v627
        %v629 = vmul.f32 %v624, %v628
        %v630 = vpack.c.bf16 %v629, %v629
        %631 = vrot.lane.b32.xlu0 %v339, 96
        %v632 = vpop.permute.xlu0 %631
        %v634 = vsel %vm396, %v630, 0
        %v637 = vsel %vm412, %v632, 0
        %639 = vmatprep.subr.bf16.mxu0 0
        %640 = vmatpush1.bf16.msra.mxu0 %v637
        %641 = vmatprep.subr.bf16.mxu0 0
        %642 = vmatpush1.bf16.msra.mxu0 0
        %643 = vmatprep.subr.bf16.mxu0 0
        %644 = vmatpush1.bf16.msra.mxu0 0
        %645 = vmatprep.subr.bf16.mxu0 0
        %646 = vmatpush1.bf16.msra.mxu0 0
        %647 = vmatprep.subr.bf16.mxu0 0
        %648 = vmatpush1.bf16.msra.mxu0 0
        %649 = vmatprep.subr.bf16.mxu0 0
        %650 = vmatpush1.bf16.msra.mxu0 0
        %651 = vmatprep.subr.bf16.mxu0 0
        %652 = vmatpush1.bf16.msra.mxu0 0
        %653 = vmatprep.subr.bf16.mxu0 0
        %654 = vmatpush1.bf16.msra.mxu0 0
        %655 = vmatprep.subr.bf16.mxu0 0
        %656 = vmatpush1.bf16.msra.mxu0 0
        %657 = vmatprep.subr.bf16.mxu0 0
        %658 = vmatpush1.bf16.msra.mxu0 0
        %659 = vmatprep.subr.bf16.mxu0 0
        %660 = vmatpush1.bf16.msra.mxu0 0
        %661 = vmatprep.subr.bf16.mxu0 0
        %662 = vmatpush1.bf16.msra.mxu0 0
        %663 = vmatprep.subr.bf16.mxu0 0
        %664 = vmatpush1.bf16.msra.mxu0 0
        %665 = vmatprep.subr.bf16.mxu0 0
        %666 = vmatpush1.bf16.msra.mxu0 0
        %667 = vmatprep.subr.bf16.mxu0 0
        %668 = vmatpush1.bf16.msra.mxu0 0
        %669 = vmatprep.subr.bf16.mxu0 0
        %670 = vmatpush1.bf16.msra.mxu0 0
        %671 = vmatprep.mubr.bf16.mxu0 0
        %672 = vmatmul.mubr.bf16.gmra.mrb[0].mxu0 %v634
        %v673 = vpop.f32.mrb[0].mxu0
        %v674 = vadd.f32 0.0, %v673
        %v675 = vpop.f32.mrb[0].mxu0
        %v676 = vpop.f32.mrb[0].mxu0
        %v677 = vpop.f32.mrb[0].mxu0
        %678 = vdwg.mxu0
        %679 = vrot.lane.b32.xlu0 %v338, 80
        %v680 = vpop.permute.xlu0 %679
        %681 = vrot.lane.b32.xlu0 %v338, 16
        %v682 = vpop.permute.xlu0 %681
        %v684 = vsel %vm348, %v680, 0
        %v687 = vsel %vm348, %v682, 0
        %689 = vmatprep.subr.bf16.mxu0 0
        %690 = vmatpush1.bf16.xpose.msra.mxu0 %v687
        %691 = vmatprep.subr.bf16.mxu0 0
        %692 = vmatpush1.bf16.xpose.msra.mxu0 0
        %693 = vmatprep.subr.bf16.mxu0 0
        %694 = vmatpush1.bf16.xpose.msra.mxu0 0
        %695 = vmatprep.subr.bf16.mxu0 0
        %696 = vmatpush1.bf16.xpose.msra.mxu0 0
        %697 = vmatprep.subr.bf16.mxu0 0
        %698 = vmatpush1.bf16.xpose.msra.mxu0 0
        %699 = vmatprep.subr.bf16.mxu0 0
        %700 = vmatpush1.bf16.xpose.msra.mxu0 0
        %701 = vmatprep.subr.bf16.mxu0 0
        %702 = vmatpush1.bf16.xpose.msra.mxu0 0
        %703 = vmatprep.subr.bf16.mxu0 0
        %704 = vmatpush1.bf16.xpose.msra.mxu0 0
        %705 = vmatprep.subr.bf16.mxu0 0
        %706 = vmatpush1.bf16.xpose.msra.mxu0 0
        %707 = vmatprep.subr.bf16.mxu0 0
        %708 = vmatpush1.bf16.xpose.msra.mxu0 0
        %709 = vmatprep.subr.bf16.mxu0 0
        %710 = vmatpush1.bf16.xpose.msra.mxu0 0
        %711 = vmatprep.subr.bf16.mxu0 0
        %712 = vmatpush1.bf16.xpose.msra.mxu0 0
        %713 = vmatprep.subr.bf16.mxu0 0
        %714 = vmatpush1.bf16.xpose.msra.mxu0 0
        %715 = vmatprep.subr.bf16.mxu0 0
        %716 = vmatpush1.bf16.xpose.msra.mxu0 0
        %717 = vmatprep.subr.bf16.mxu0 0
        %718 = vmatpush1.bf16.xpose.msra.mxu0 0
        %719 = vmatprep.subr.bf16.mxu0 0
        %720 = vmatpush1.bf16.xpose.msra.mxu0 0
        %721 = vmatprep.mubr.bf16.mxu0 0
        %722 = vmatmul.mubr.bf16.gmra.mrb[0].mxu0 %v684
        %v723 = vpop.f32.mrb[0].mxu0
        %v724 = vadd.f32 0.0, %v723
        %v725 = vpop.f32.mrb[0].mxu0
        %v726 = vpop.f32.mrb[0].mxu0
        %v727 = vpop.f32.mrb[0].mxu0
        %728 = vdwg.mxu0
        %v729 = vsel %vm344, %v724, -1e+30
        %v730 = vsel %vm396, %v729, -inf
        %731 = vmax.xlane.f32.xlu0 %v730
        %v732 = vpop.xlane.xlu0 %731
        %v733 = vsub.f32 %v729, %v732
        %v734 = vmul.f32 %v733, 1.442695
        %v735 = vpow.pop %v734
        %v736 = vsel %vm396, %v735, 0.0
        %737 = vadd.xlane.f32.xlu0 %v736
        %v738 = vpop.xlane.xlu0 %737
        %v739 = vrcp.pop %v738
        %v740 = vmul.f32 %v735, %v739
        %v741 = vpack.c.bf16 %v740, %v740
        %742 = vrot.lane.b32.xlu0 %v339, 80
        %v743 = vpop.permute.xlu0 %742
        %v745 = vsel %vm396, %v741, 0
        %v748 = vsel %vm412, %v743, 0
        %750 = vmatprep.subr.bf16.mxu0 0
        %751 = vmatpush1.bf16.msra.mxu0 %v748
        %752 = vmatprep.subr.bf16.mxu0 0
        %753 = vmatpush1.bf16.msra.mxu0 0
        %754 = vmatprep.subr.bf16.mxu0 0
        %755 = vmatpush1.bf16.msra.mxu0 0
        %756 = vmatprep.subr.bf16.mxu0 0
        %757 = vmatpush1.bf16.msra.mxu0 0
        %758 = vmatprep.subr.bf16.mxu0 0
        %759 = vmatpush1.bf16.msra.mxu0 0
        %760 = vmatprep.subr.bf16.mxu0 0
        %761 = vmatpush1.bf16.msra.mxu0 0
        %762 = vmatprep.subr.bf16.mxu0 0
        %763 = vmatpush1.bf16.msra.mxu0 0
        %764 = vmatprep.subr.bf16.mxu0 0
        %765 = vmatpush1.bf16.msra.mxu0 0
        %766 = vmatprep.subr.bf16.mxu0 0
        %767 = vmatpush1.bf16.msra.mxu0 0
        %768 = vmatprep.subr.bf16.mxu0 0
        %769 = vmatpush1.bf16.msra.mxu0 0
        %770 = vmatprep.subr.bf16.mxu0 0
        %771 = vmatpush1.bf16.msra.mxu0 0
        %772 = vmatprep.subr.bf16.mxu0 0
        %773 = vmatpush1.bf16.msra.mxu0 0
        %774 = vmatprep.subr.bf16.mxu0 0
        %775 = vmatpush1.bf16.msra.mxu0 0
        %776 = vmatprep.subr.bf16.mxu0 0
        %777 = vmatpush1.bf16.msra.mxu0 0
        %778 = vmatprep.subr.bf16.mxu0 0
        %779 = vmatpush1.bf16.msra.mxu0 0
        %780 = vmatprep.subr.bf16.mxu0 0
        %781 = vmatpush1.bf16.msra.mxu0 0
        %782 = vmatprep.mubr.bf16.mxu0 0
        %783 = vmatmul.mubr.bf16.gmra.mrb[0].mxu0 %v745
        %v784 = vpop.f32.mrb[0].mxu0
        %v785 = vadd.f32 0.0, %v784
        %v786 = vpop.f32.mrb[0].mxu0
        %v787 = vpop.f32.mrb[0].mxu0
        %v788 = vpop.f32.mrb[0].mxu0
        %789 = vdwg.mxu0
        %791 = vrot.lane.b32.xlu0 %v563, 16
        %v792 = vpop.permute.xlu0 %791
        %795 = vrot.lane.b32.xlu0 %v674, 32
        %v796 = vpop.permute.xlu0 %795
        %799 = vrot.lane.b32.xlu0 %v785, 48
        %v800 = vpop.permute.xlu0 %799
        %v802 = vsel %vm348, %v451, %v792
        %vm803 = vcmask 261120
        %v804 = vsel %vm803, %v802, %v796
        %vm805 = vcmask 392192
        %v806 = vsel %vm805, %v804, %v800
        %v807 = vpack.c.bf16 %v806, %v806
        %v808 = vld [vmem:[#allocation7] sm:$0xf]
        %v809 = vld [vmem:[#allocation7 + $0x4] sm:$0xf]
        %v810 = vld [vmem:[#allocation7 + $0x8] sm:$0xf]
        %v811 = vld [vmem:[#allocation7 + $0xc] sm:$0xf]
        %v812 = vld [vmem:[#allocation7 + $0x10] sm:$0xf]
        %v813 = vld [vmem:[#allocation7 + $0x14] sm:$0xf]
        %v814 = vld [vmem:[#allocation7 + $0x18] sm:$0xf]
        %v815 = vld [vmem:[#allocation7 + $0x1c] sm:$0xf]
        %v816 = vld [vmem:[%s3] sm:$0x1]
        %v818 = vlaneseq
        %v819 = vshrl.u32 %v818, 7
        %v820 = vsub.s32 0, %v819
        %v821 = vrot.slane %v816, %v820
        %v831 = vunpack.c.l.b16 %v808
        %v832 = vunpack.c.l.b16 %v809
        %v833 = vunpack.c.l.b16 %v810
        %v834 = vunpack.c.l.b16 %v811
        %v835 = vunpack.c.l.b16 %v812
        %v836 = vunpack.c.l.b16 %v813
        %v837 = vunpack.c.l.b16 %v814
        %v838 = vunpack.c.l.b16 %v815
        %v839 = vpack.c.b16 %v832, %v831
        %v840 = vpack.c.b16 %v834, %v833
        %v841 = vpack.c.b16 %v836, %v835
        %v842 = vpack.c.b16 %v838, %v837
        %v848 = vsel %vm293, %v807, 0
        %850 = vmatprep.subr.bf16.mxu0 0
        %851 = vmatpush1.bf16.msra.mxu0 %v839
        %852 = vmatprep.subr.bf16.mxu0 0
        %853 = vmatpush1.bf16.msra.mxu0 %v840
        %854 = vmatprep.subr.bf16.mxu0 0
        %855 = vmatpush1.bf16.msra.mxu0 %v841
        %856 = vmatprep.subr.bf16.mxu0 0
        %857 = vmatpush1.bf16.msra.mxu0 %v842
        %858 = vmatprep.subr.bf16.mxu0 0
        %859 = vmatpush1.bf16.msra.mxu0 0
        %860 = vmatprep.subr.bf16.mxu0 0
        %861 = vmatpush1.bf16.msra.mxu0 0
        %862 = vmatprep.subr.bf16.mxu0 0
        %863 = vmatpush1.bf16.msra.mxu0 0
        %864 = vmatprep.subr.bf16.mxu0 0
        %865 = vmatpush1.bf16.msra.mxu0 0
        %866 = vmatprep.subr.bf16.mxu0 0
        %867 = vmatpush1.bf16.msra.mxu0 0
        %868 = vmatprep.subr.bf16.mxu0 0
        %869 = vmatpush1.bf16.msra.mxu0 0
        %870 = vmatprep.subr.bf16.mxu0 0
        %871 = vmatpush1.bf16.msra.mxu0 0
        %872 = vmatprep.subr.bf16.mxu0 0
        %873 = vmatpush1.bf16.msra.mxu0 0
        %874 = vmatprep.subr.bf16.mxu0 0
        %875 = vmatpush1.bf16.msra.mxu0 0
        %876 = vmatprep.subr.bf16.mxu0 0
        %877 = vmatpush1.bf16.msra.mxu0 0
        %878 = vmatprep.subr.bf16.mxu0 0
        %879 = vmatpush1.bf16.msra.mxu0 0
        %880 = vmatprep.subr.bf16.mxu0 0
        %881 = vmatpush1.bf16.msra.mxu0 0
        %882 = vmatprep.mubr.bf16.mxu0 0
        %883 = vmatmul.mubr.bf16.gmra.mrb[0].mxu0 %v848
        %v884 = vpop.f32.mrb[0].mxu0
        %v885 = vadd.f32 %v821, %v884
        %v886 = vpop.f32.mrb[0].mxu0
        %v887 = vpop.f32.mrb[0].mxu0
        %v888 = vpop.f32.mrb[0].mxu0
        %889 = vdwg.mxu0
        %890 = vst.msk [vmem:[%s241] sm:$0xff] %vm293, %v885
        %s891 = sand.u32 %s119, 1
        %s892 = scalar_lea.sflag [#allocation4], %s891
        %s893 = sand.u32 %s119, 1
        %s894 = smul.addr %s893, 8
        %s895 = scalar_lea.vmem [#allocation8], %s894
        // Predicated region
        $region49: #{multi_head_attention.1} parent=35 // pred_check
          %p896 = pneg %p129
        $region50: #{multi_head_attention.1} parent=35 // pred_check_branch
          %898 = sbr.rel (%p896) target = $region52
        $region51: #{multi_head_attention.1} parent=35 // pred_region
          %s900 = ssub.s32 128, 128
          %901 = vsyncadd %s892, %s900
          %s902 = smul.addr %s22, 128
          %s903 = scalar_lea.hbm %s4, %s902
          %s905 = sshll.u32 %s895, 4
          %s906 = int_to_ptr.vmem [resolvable:$true] %s905
          %908 = dma.vmem_to_hbm [thread:$0]  %s906, 128, %s903, %s892
        $region52: #{multi_head_attention.1} parent=35 // pred_fallthru
          _
      $region36: #{multi_head_attention.1} parent=5 // pred_fallthru
        _
      %p909 = scmp.le.s32.totalorder 2, %s17
      // Predicated region
      $region53: #{multi_head_attention.1} parent=5 // pred_check
        %p910 = pneg %p909
      $region54: #{multi_head_attention.1} parent=5 // pred_check_branch
        %912 = sbr.rel (%p910) target = $region56
      $region55: #{multi_head_attention.1} parent=5 // pred_region
        %s913 = ssub.s32 %s17, 2
        // Predicated region
        $region57: #{multi_head_attention.1} parent=55 // pred_check
          %p914 = pneg %p135
        $region58: #{multi_head_attention.1} parent=55 // pred_check_branch
          %916 = sbr.rel (%p914) target = $region60
        $region59: #{multi_head_attention.1} parent=55 // pred_region
          %s917 = sand.u32 %s120, 1
          %s918 = scalar_lea.sflag [#allocation4], %s917
          %s919 = sand.u32 %s120, 1
          %s920 = smul.addr %s919, 8
          %s921 = scalar_lea.vmem [#allocation8], %s920
          %922 = dma.done %s918, 128
        $region60: #{multi_head_attention.1} parent=55 // pred_fallthru
          _
      $region56: #{multi_head_attention.1} parent=5 // pred_fallthru
        _
    $region6: #{multi_head_attention.1} parent=1 // loop_footer
      %s21 = sadd.s32 1, %s17
    $region7: #{multi_head_attention.1} parent=1 // loop_footer_branch
      %16 = sbr.rel target = $region3
    $region8: #{multi_head_attention.1} parent=1 // loop_exit
      _
    %923 = vsyncpa [#allocation3], 1
    %s924 = scalar_lea.sflag [#allocation3], 1
    %925 = vsyncpa %s924, 1
    %926 = vsyncpa [#allocation6], 1
    %927 = vsyncpa [#allocation4], 1
    %s928 = scalar_lea.sflag [#allocation4], 1
    %929 = vsyncpa %s928, 1

</llo_original>
